<compile_context>
chip_gen: v5e
topology: v5e:2x2
jax: 0.10.0
libtpu: 0.0.40
codegen_flags: <defaults>
</compile_context>

<pallas_src>
import functools

import jax
import jax.numpy as jnp
from jax.experimental import pallas as pl
from jax.experimental.pallas import tpu as pltpu


# ---------------------------------------------------------------------------
# Kernels
# ---------------------------------------------------------------------------

def _se_fused_kernel(x_ref, w1t_ref, w2t_ref, out_ref, *, inv_hw):
    """Fused squeeze -> excitation -> scale for one (TB, C, HWp) block.

    x_ref:   (TB, C, HWp)  batch group, spatial flattened (HW on lanes,
                           zero-padded to a multiple of 128).
    w1t_ref: (C, C_red)    first Linear weight, pre-transposed in the wrapper.
    w2t_ref: (C_red, C)    second Linear weight, pre-transposed in the wrapper.
    out_ref: (TB, C, HWp)
    """
    x = x_ref[...]

    # Squeeze: global average pool over the lane axis.  Padded lanes are zero,
    # so summing and dividing by the *true* HW gives the exact mean.  f32 acc.
    y = jnp.sum(x.astype(jnp.float32), axis=-1) * inv_hw              # (TB, C)

    # Excitation: Linear -> ReLU -> Linear -> Sigmoid, batched over TB.
    h = jnp.dot(y, w1t_ref[...].astype(jnp.float32),
                preferred_element_type=jnp.float32)                   # (TB, C_red)
    h = jnp.maximum(h, 0.0)
    s = jax.nn.sigmoid(jnp.dot(h, w2t_ref[...].astype(jnp.float32),
                               preferred_element_type=jnp.float32))   # (TB, C)

    # Scale: broadcast the per-(batch, channel) gate over the HW lanes and
    # store in the input dtype (lane-dense, unmasked stores).
    out_ref[...] = x * s[:, :, None].astype(x.dtype)


def _se_scale_kernel(x_ref, s_ref, out_ref):
    """Streaming scale pass: out = x * gate, gates precomputed per (b, c).

    x_ref: (1, C, HW_TILE); s_ref: (1, C, 1) f32 gates; out_ref like x_ref.
    """
    out_ref[...] = x_ref[...] * s_ref[...].astype(x_ref.dtype)


# ---------------------------------------------------------------------------
# Sizing helpers (plain Python, evaluated at trace time)
# ---------------------------------------------------------------------------

_TARGET_BLOCK_BYTES = 2 * 1024 * 1024   # ~1-4 MiB is the measured HBM sweet spot


def _vmem_limit_bytes():
    """~75% of physical VMEM, capped at 100 MiB.

    -> ~48 MiB on v7x (64 MiB / TensorCore), ~96 MiB on v5e / v6e (128 MiB).
    """
    try:
        cap = pltpu.get_tpu_info().vmem_capacity_bytes
    except Exception:
        cap = 64 * 1024 * 1024           # conservative (v7x per-core) fallback
    return int(min(cap * 3 // 4, 100 * 1024 * 1024))


def _choose_tb(b, per_batch_bytes, vmem_budget):
    """Batch elements per grid step for the fused kernel."""
    # Default 2-deep pipelining holds 2x input + 2x output blocks in VMEM.
    cap_by_vmem = max(1, vmem_budget // (4 * per_batch_bytes))
    tb = max(1, min(b, _TARGET_BLOCK_BYTES // per_batch_bytes, cap_by_vmem))
    # Prefer >= 2 grid steps so v7x's two TensorCores both get work, unless
    # that would shrink otherwise-healthy (>= ~1 MiB) blocks.
    if b >= 2 and tb >= b:
        half = b // 2
        if (half * per_batch_bytes >= (1 << 20)
                or b * per_batch_bytes < 2 * _TARGET_BLOCK_BYTES):
            tb = half
    tb = max(1, min(tb, b))
    while b % tb:                        # exact grid (no ragged last block)
        tb -= 1
    return tb


def _choose_hw_tile(hw_p, c, itemsize):
    """Largest multiple-of-128 divisor of hw_p whose block stays near target."""
    m = hw_p // 128
    bound = max(_TARGET_BLOCK_BYTES, c * 128 * itemsize)
    best = 128
    for d in range(1, m + 1):
        if m % d == 0 and c * (128 * d) * itemsize <= bound:
            best = 128 * d
    return best


# ---------------------------------------------------------------------------
# Wrapper
# ---------------------------------------------------------------------------

def se_block(x, w1, w2, *, force_two_pass=False):
    """Squeeze-and-Excitation forward.

    x:  (B, C, H, W)
    w1: (C // r, C)   nn.Linear (out_features, in_features), bias=False
    w2: (C, C // r)
    Returns (B, C, H, W).
    """
    b, c, h, w = x.shape
    c_red = w1.shape[0]
    hw = h * w
    itemsize = jnp.dtype(x.dtype).itemsize

    # Lane-dense store path: flatten spatial dims onto lanes and zero-pad HW
    # up to a multiple of 128 (zeros do not perturb the sum-based mean; the
    # padded columns are sliced off below).
    hw_p = -(-hw // 128) * 128
    x_flat = x.reshape(b, c, hw)
    if hw_p != hw:
        x_flat = jnp.pad(x_flat, ((0, 0), (0, 0), (0, hw_p - hw)))

    vmem_limit = _vmem_limit_bytes()
    per_batch_bytes = c * hw_p * itemsize
    # Single pass needs 2x in + 2x out blocks (TB >= 1) + headroom in VMEM.
    single_pass_ok = 4 * per_batch_bytes <= int(0.8 * vmem_limit)

    if single_pass_ok and not force_two_pass:
        tb = _choose_tb(b, per_batch_bytes, int(0.8 * vmem_limit))
        # Tiny one-time weight transposes in the wrapper -> vanilla last-dim
        # contractions inside the kernel, no in-kernel transposes.
        w1t = w1.T                                   # (C, C_red)
        w2t = w2.T                                   # (C_red, C)
        kernel = functools.partial(_se_fused_kernel, inv_hw=1.0 / hw)
        out_flat = pl.pallas_call(
            kernel,
            out_shape=jax.ShapeDtypeStruct((b, c, hw_p), x.dtype),
            grid=(b // tb,),
            in_specs=[
                pl.BlockSpec((tb, c, hw_p), lambda i: (i, 0, 0)),
                # Tiny weights: full arrays resident in VMEM every step.
                pl.BlockSpec((c, c_red), lambda i: (0, 0)),
                pl.BlockSpec((c_red, c), lambda i: (0, 0)),
            ],
            out_specs=pl.BlockSpec((tb, c, hw_p), lambda i: (i, 0, 0)),
            compiler_params=pltpu.CompilerParams(
                dimension_semantics=("parallel",),   # megacore sharding on v7x
                vmem_limit_bytes=vmem_limit,
            ),
        )(x_flat, w1t, w2t)
    else:
        # Two-pass escape hatch for large C*HW: (1) squeeze + excitation in
        # plain JAX (tiny), (2) streaming lane-dense scale kernel tiled over
        # (batch, HW tiles), free choice of tile size.
        y = jnp.mean(x.astype(jnp.float32), axis=(2, 3))             # (B, C)
        hid = jnp.maximum(y @ w1.astype(jnp.float32).T, 0.0)
        gates = jax.nn.sigmoid(hid @ w2.astype(jnp.float32).T)       # (B, C)
        gates = gates.reshape(b, c, 1)

        hw_tile = _choose_hw_tile(hw_p, c, itemsize)
        out_flat = pl.pallas_call(
            _se_scale_kernel,
            out_shape=jax.ShapeDtypeStruct((b, c, hw_p), x.dtype),
            grid=(b, hw_p // hw_tile),
            in_specs=[
                pl.BlockSpec((1, c, hw_tile), lambda i, j: (i, 0, j)),
                pl.BlockSpec((1, c, 1), lambda i, j: (i, 0, 0)),
            ],
            out_specs=pl.BlockSpec((1, c, hw_tile), lambda i, j: (i, 0, j)),
            compiler_params=pltpu.CompilerParams(
                dimension_semantics=("parallel", "parallel"),
                vmem_limit_bytes=vmem_limit,
            ),
        )(x_flat, gates)

    if hw_p != hw:
        out_flat = out_flat[:, :, :hw]
    return out_flat.reshape(b, c, h, w)


# ---------------------------------------------------------------------------
# Self-test
# ---------------------------------------------------------------------------

if __name__ == "__main__":
    # Module config: channel_in=8, reduction=2 -> hidden = 4.
    B, C, H, W = 2, 8, 16, 16
    reduction = 2
    C_red = C // reduction

    key = jax.random.PRNGKey(0)
    kx, k1, k2 = jax.random.split(key, 3)

    x = jax.random.normal(kx, (B, C, H, W), dtype=jnp.float32)
    # nn.Linear weight layout: (out_features, in_features), bias=False.
    w1 = jax.random.normal(k1, (C_red, C), dtype=jnp.float32) * 0.1
    w2 = jax.random.normal(k2, (C, C_red), dtype=jnp.float32) * 0.1

    def ref_fn(xr, w1r, w2r):
        yr = jnp.mean(xr.astype(jnp.float32), axis=(2, 3))
        hr = jnp.maximum(yr @ w1r.astype(jnp.float32).T, 0.0)
        sr = jax.nn.sigmoid(hr @ w2r.astype(jnp.float32).T)
        return (xr.astype(jnp.float32) * sr[:, :, None, None]).astype(xr.dtype)

    # Single-pass fused path (HW = 256, already lane-dense, TB folding active).
    out = se_block(x, w1, w2)
    jax.block_until_ready(out)
    assert jnp.allclose(out, ref_fn(x, w1, w2), atol=1e-5, rtol=1e-5)

    # Non-multiple-of-128 spatial size (7x7 -> HW=49): exercises HW padding.
    x2 = jax.random.normal(jax.random.PRNGKey(1), (B, C, 7, 7), dtype=jnp.float32)
    out2 = se_block(x2, w1, w2)
    jax.block_until_ready(out2)
    assert jnp.allclose(out2, ref_fn(x2, w1, w2), atol=1e-5, rtol=1e-5)

    # Two-pass (streaming scale) escape hatch, forced at small size for test.
    out3 = se_block(x, w1, w2, force_two_pass=True)
    jax.block_until_ready(out3)
    assert jnp.allclose(out3, ref_fn(x, w1, w2), atol=1e-5, rtol=1e-5)

    print("KERNEL_OK")
</pallas_src>

<mosaic_0001>
module attributes {stable_mosaic.version = 11 : i64} {
  func.func @_se_fused_kernel(%arg0: i32, %arg1: memref<1x8x256xf32, #tpu.memory_space<vmem>>, %arg2: memref<8x4xf32, #tpu.memory_space<vmem>>, %arg3: memref<4x8xf32, #tpu.memory_space<vmem>>, %arg4: memref<1x8x256xf32, #tpu.memory_space<vmem>>) attributes {dimension_semantics = [#tpu.dimension_semantics<parallel>], iteration_bounds = array<i64: 2>, scalar_prefetch = 0 : i64, scratch_operands = 0 : i64, tpu.core_type = #tpu.core_type<tc>, window_params = [{transform_indices = @transform_0, window_bounds = array<i64: 1, 8, 256>}, {pipeline_mode = #tpu.pipeline_mode<synchronous>, transform_indices = @transform_1, window_bounds = array<i64: 8, 4>}, {pipeline_mode = #tpu.pipeline_mode<synchronous>, transform_indices = @transform_2, window_bounds = array<i64: 4, 8>}, {transform_indices = @transform_3, window_bounds = array<i64: 1, 8, 256>}]} {
    %c0 = arith.constant 0 : index
    %c0_0 = arith.constant 0 : index
    %c0_1 = arith.constant 0 : index
    %0 = vector.load %arg1[%c0, %c0_0, %c0_1] : memref<1x8x256xf32, #tpu.memory_space<vmem>>, vector<1x8x256xf32>
    %cst = arith.constant dense<0.000000e+00> : vector<1x8xf32>
    %1 = vector.multi_reduction <add>, %0, %cst [2] : vector<1x8x256xf32> to vector<1x8xf32>
    %cst_2 = arith.constant 3.906250e-03 : f32
    %2 = vector.broadcast %cst_2 : f32 to vector<1x8xf32>
    %3 = arith.mulf %1, %2 : vector<1x8xf32>
    %c0_3 = arith.constant 0 : index
    %c0_4 = arith.constant 0 : index
    %4 = vector.load %arg2[%c0_3, %c0_4] : memref<8x4xf32, #tpu.memory_space<vmem>>, vector<8x4xf32>
    %cst_5 = arith.constant dense<0.000000e+00> : vector<1x4xf32>
    %5 = tpu.matmul %3, %4, %cst_5 {dimension_numbers = #tpu.dot_dimension_numbers<[1], [0], [0], [1], [0, 0, 1, 1], [], []>} : vector<1x8xf32>, vector<8x4xf32>, vector<1x4xf32> -> vector<1x4xf32>
    %cst_6 = arith.constant 0.000000e+00 : f32
    %6 = vector.broadcast %cst_6 : f32 to vector<1x4xf32>
    %7 = arith.maximumf %5, %6 : vector<1x4xf32>
    %c0_7 = arith.constant 0 : index
    %c0_8 = arith.constant 0 : index
    %8 = vector.load %arg3[%c0_7, %c0_8] : memref<4x8xf32, #tpu.memory_space<vmem>>, vector<4x8xf32>
    %cst_9 = arith.constant dense<0.000000e+00> : vector<1x8xf32>
    %9 = tpu.matmul %7, %8, %cst_9 {dimension_numbers = #tpu.dot_dimension_numbers<[1], [0], [0], [1], [0, 0, 1, 1], [], []>} : vector<1x4xf32>, vector<4x8xf32>, vector<1x8xf32> -> vector<1x8xf32>
    %10 = arith.negf %9 : vector<1x8xf32>
    %11 = math.exp %10 : vector<1x8xf32>
    %cst_10 = arith.constant 1.000000e+00 : f32
    %12 = vector.broadcast %cst_10 : f32 to vector<1x8xf32>
    %13 = arith.addf %12, %11 : vector<1x8xf32>
    %14 = arith.divf %12, %13 : vector<1x8xf32>
    %15 = vector.shape_cast %14 : vector<1x8xf32> to vector<1x8x1xf32>
    %16 = vector.broadcast %15 : vector<1x8x1xf32> to vector<1x8x256xf32>
    %17 = arith.mulf %0, %16 : vector<1x8x256xf32>
    %c0_11 = arith.constant 0 : index
    %c0_12 = arith.constant 0 : index
    %c0_13 = arith.constant 0 : index
    %18 = vector.load %arg4[%c0_11, %c0_12, %c0_13] : memref<1x8x256xf32, #tpu.memory_space<vmem>>, vector<1x8x256xf32>
    tpu.vector_store %arg4[%c0_11, %c0_12, %c0_13], %17 {strides = array<i32>} : memref<1x8x256xf32, #tpu.memory_space<vmem>>, vector<1x8x256xf32>,
    return
  }
  func.func @transform_0(%arg0: i32) -> (i32, i32, i32) {
    %c0_i32 = arith.constant 0 : i32
    %c0_i32_0 = arith.constant 0 : i32
    %c0_i32_1 = arith.constant 0 : i32
    return %arg0, %c0_i32, %c0_i32_0 : i32, i32, i32
  }
  func.func @transform_1(%arg0: i32) -> (i32, i32) {
    %c0_i32 = arith.constant 0 : i32
    %c0_i32_0 = arith.constant 0 : i32
    %c0_i32_1 = arith.constant 0 : i32
    return %c0_i32, %c0_i32_0 : i32, i32
  }
  func.func @transform_2(%arg0: i32) -> (i32, i32) {
    %c0_i32 = arith.constant 0 : i32
    %c0_i32_0 = arith.constant 0 : i32
    %c0_i32_1 = arith.constant 0 : i32
    return %c0_i32, %c0_i32_0 : i32, i32
  }
  func.func @transform_3(%arg0: i32) -> (i32, i32, i32) {
    %c0_i32 = arith.constant 0 : i32
    %c0_i32_0 = arith.constant 0 : i32
    %c0_i32_1 = arith.constant 0 : i32
    return %arg0, %c0_i32, %c0_i32_0 : i32, i32, i32
  }
}

</mosaic_0001>

<llo_original>
// kernel: tpu_custom_call.1
$region0: #{tpu_custom_call.1}
  #allocation0 [shape = 'u32[]', space=smem, size = 0x4, offset = 0x4, fixed_abs, tag = 'smem constant byte address 0x4 - core index']
  #allocation1 [shape = 'u32[72,128]{1,0:T(1,128)}', space=vmem, size = 0x9000, scoped, tag = 'internal scratch']
  %s0 = inlined_call_operand.hbm [shape: f32[2,8,256], index: 0, kind: input, shape index: {}]
  %s1 = inlined_call_operand.vmem [shape: f32[8,4], index: 1, kind: input, shape index: {}]
  %s2 = inlined_call_operand.vmem [shape: f32[4,8], index: 2, kind: input, shape index: {}]
  %s3 = inlined_call_operand.hbm [shape: f32[2,8,256], index: 3, kind: output, shape index: {}]
  %s4 = sld [smem:[#allocation0]]
  $region49: #{tpu_custom_call.1} parent=0
    _
  %s6 = ssub.s32 1, %s4
  %s7 = scalar_select 0, %s6, %s4
  $region1: #{tpu_custom_call.1} parent=0
    #allocation2 [shape = 'u8[16384]{0}', space=vmem, size = 0x4000, scoped, tag = 'input window, operand 0']
    #allocation3 [shape = 's32[2]{0}', space=sflag, size = 0x8, scoped, tag = 'scoped memory for tpu_custom_call.1']
    #allocation4 [shape = 's32[2]{0}', space=sflag, size = 0x8, scoped, tag = 'scoped memory for tpu_custom_call.1']
    #allocation5 [shape = 'u8[16384]{0}', space=vmem, size = 0x4000, scoped, tag = 'output window, operand 0']
    %8 = vsyncpa [#allocation3], 0
    %s9 = scalar_lea.sflag [#allocation3], 1
    %10 = vsyncpa %s9, 0
    %11 = vsyncpa [#allocation4], 0
    %s12 = scalar_lea.sflag [#allocation4], 1
    %13 = vsyncpa %s12, 0
    loop: start=0, step=1, limit=4
    $region2: #{tpu_custom_call.1} parent=1 // loop_pre_header
      _
    $region3: #{tpu_custom_call.1} parent=1 // loop_header
      %s15 = sphi 0, %s19
      %p16 = scmp.ge.s32.totalorder %s15, 4
      %s25 = sphi 0, %s27
      %s28 = sphi 0, %s25
      %s29 = sphi 0, %s28
      %s45 = sphi 0, %s29
      %s49 = sphi 0, %s49
      %s51 = sphi 0, %s49
      %s52 = sphi 0, %s51
      %s66 = sphi 0, %s52
      %s70 = sphi 0, %s70
      %s72 = sphi 0, %s70
      %s73 = sphi 0, %s72
      %s87 = sphi 0, %s73
      %s93 = sphi 0, %s95
      %s96 = sphi 0, %s93
      %s97 = sphi 0, %s96
      %s113 = sphi 0, %s97
    $region4: #{tpu_custom_call.1} parent=1 // loop_header_branch
      %18 = sbr.rel (%p16) target = $region8
    $region5: #{tpu_custom_call.1} parent=1 // loop_body
      %s20 = ssub.s32 %s15, 1
      %s21 = ssub.s32 %s15, 2
      %s22 = sadd.s32 %s15, 1
      %s23 = ssub.s32 %s15, %s22
      %p24 = scmp.eq.s32.totalorder %s23, 0
      %s26 = sadd.s32 %s25, 1
      %s27 = scalar_select %p24, %s25, %s26
      %p30 = pneg %p24
      %p31 = scmp.eq.s32.totalorder %s15, 1
      %p32 = por %p30, %p31
      %p33 = scmp.ne.s32.totalorder %s25, %s28
      %p34 = scmp.eq.s32.totalorder %s15, 0
      %p35 = por %p33, %p34
      %p36 = scmp.ne.s32.totalorder %s25, %s28
      %p37 = scmp.eq.s32.totalorder %s20, 1
      %p38 = por %p36, %p37
      %p39 = scmp.ne.s32.totalorder %s28, %s29
      %p40 = scmp.eq.s32.totalorder %s20, 0
      %p41 = por %p39, %p40
      %p42 = scmp.ne.s32.totalorder %s28, %s29
      %p43 = scmp.eq.s32.totalorder %s21, 1
      %p44 = por %p42, %p43
      %p46 = scmp.ne.s32.totalorder %s29, %s45
      %p47 = scmp.eq.s32.totalorder %s21, 0
      %p48 = por %p46, %p47
      %s50 = sadd.s32 %s49, 1
      %p53 = scmp.eq.s32.totalorder %s15, 1
      %p54 = scmp.ne.s32.totalorder %s49, %s51
      %p55 = scmp.eq.s32.totalorder %s15, 0
      %p56 = por %p54, %p55
      %p57 = scmp.ne.s32.totalorder %s49, %s51
      %p58 = scmp.eq.s32.totalorder %s20, 1
      %p59 = por %p57, %p58
      %p60 = scmp.ne.s32.totalorder %s51, %s52
      %p61 = scmp.eq.s32.totalorder %s20, 0
      %p62 = por %p60, %p61
      %p63 = scmp.ne.s32.totalorder %s51, %s52
      %p64 = scmp.eq.s32.totalorder %s21, 1
      %p65 = por %p63, %p64
      %p67 = scmp.ne.s32.totalorder %s52, %s66
      %p68 = scmp.eq.s32.totalorder %s21, 0
      %p69 = por %p67, %p68
      %s71 = sadd.s32 %s70, 1
      %p74 = scmp.eq.s32.totalorder %s15, 1
      %p75 = scmp.ne.s32.totalorder %s70, %s72
      %p76 = scmp.eq.s32.totalorder %s15, 0
      %p77 = por %p75, %p76
      %p78 = scmp.ne.s32.totalorder %s70, %s72
      %p79 = scmp.eq.s32.totalorder %s20, 1
      %p80 = por %p78, %p79
      %p81 = scmp.ne.s32.totalorder %s72, %s73
      %p82 = scmp.eq.s32.totalorder %s20, 0
      %p83 = por %p81, %p82
      %p84 = scmp.ne.s32.totalorder %s72, %s73
      %p85 = scmp.eq.s32.totalorder %s21, 1
      %p86 = por %p84, %p85
      %p88 = scmp.ne.s32.totalorder %s73, %s87
      %p89 = scmp.eq.s32.totalorder %s21, 0
      %p90 = por %p88, %p89
      %s91 = ssub.s32 %s15, %s22
      %p92 = scmp.eq.s32.totalorder %s91, 0
      %s94 = sadd.s32 %s93, 1
      %s95 = scalar_select %p92, %s93, %s94
      %p98 = pneg %p92
      %p99 = scmp.eq.s32.totalorder %s15, 1
      %p100 = por %p98, %p99
      %p101 = scmp.ne.s32.totalorder %s93, %s96
      %p102 = scmp.eq.s32.totalorder %s15, 0
      %p103 = por %p101, %p102
      %p104 = scmp.ne.s32.totalorder %s93, %s96
      %p105 = scmp.eq.s32.totalorder %s20, 1
      %p106 = por %p104, %p105
      %p107 = scmp.ne.s32.totalorder %s96, %s97
      %p108 = scmp.eq.s32.totalorder %s20, 0
      %p109 = por %p107, %p108
      %p110 = scmp.ne.s32.totalorder %s96, %s97
      %p111 = scmp.eq.s32.totalorder %s21, 1
      %p112 = por %p110, %p111
      %p114 = scmp.ne.s32.totalorder %s97, %s113
      %p115 = scmp.eq.s32.totalorder %s21, 0
      %p116 = por %p114, %p115
      %p117 = scmp.le.s32.totalorder 1, %s15
      %p118 = scmp.lt.s32.totalorder %s15, 3
      %p119 = pnand %p117, %p118
      %p120 = pneg %p119
      // Predicated region
      $region9: #{tpu_custom_call.1} parent=5 // pred_check
        _
      $region10: #{tpu_custom_call.1} parent=5 // pred_check_branch
        %122 = sbr.rel (%p119) target = $region12
      $region11: #{tpu_custom_call.1} parent=5 // pred_region
        %s123 = ssub.s32 %s15, 1
        // Predicated region
        $region13: #{tpu_custom_call.1} parent=11 // pred_check
          %p124 = pneg %p62
        $region14: #{tpu_custom_call.1} parent=11 // pred_check_branch
          %126 = sbr.rel (%p124) target = $region16
        $region15: #{tpu_custom_call.1} parent=11 // pred_region
          _
        $region16: #{tpu_custom_call.1} parent=11 // pred_fallthru
          _
        // Predicated region
        $region17: #{tpu_custom_call.1} parent=11 // pred_check
          %p127 = pneg %p83
        $region18: #{tpu_custom_call.1} parent=11 // pred_check_branch
          %129 = sbr.rel (%p127) target = $region20
        $region19: #{tpu_custom_call.1} parent=11 // pred_region
          _
        $region20: #{tpu_custom_call.1} parent=11 // pred_fallthru
          _
      $region12: #{tpu_custom_call.1} parent=5 // pred_fallthru
        _
      %p130 = scmp.lt.s32.totalorder %s15, 2
      // Predicated region
      $region21: #{tpu_custom_call.1} parent=5 // pred_check
        %p131 = pneg %p130
      $region22: #{tpu_custom_call.1} parent=5 // pred_check_branch
        %133 = sbr.rel (%p131) target = $region24
      $region23: #{tpu_custom_call.1} parent=5 // pred_region
        // Predicated region
        $region25: #{tpu_custom_call.1} parent=23 // pred_check
          %p134 = pneg %p35
        $region26: #{tpu_custom_call.1} parent=23 // pred_check_branch
          %136 = sbr.rel (%p134) target = $region28
        $region27: #{tpu_custom_call.1} parent=23 // pred_region
          %s137 = sand.u32 %s25, 1
          %s138 = scalar_lea.sflag [#allocation3], %s137
          %s139 = sand.u32 %s25, 1
          %s140 = smul.addr %s139, 16
          %s141 = scalar_lea.vmem [#allocation2], %s140
          %143 = vsyncadd %s138, 0
          %s144 = smul.addr %s15, 2
          %s145 = smul.addr %s144, 8
          %s146 = scalar_lea.hbm %s0, %s145
          %s148 = sshll.u32 %s146, 4
          %s149 = int_to_ptr.hbm [resolvable:$true] %s148
          %s150 = sshll.u32 %s141, 4
          %s151 = int_to_ptr.vmem [resolvable:$true] %s150
          %153 = dma.hbm_to_vmem [thread:$0]  %s149, 256, %s151, %s138
        $region28: #{tpu_custom_call.1} parent=23 // pred_fallthru
          _
      $region24: #{tpu_custom_call.1} parent=5 // pred_fallthru
        _
      %p154 = scmp.le.s32.totalorder 1, %s15
      %p155 = scmp.lt.s32.totalorder %s15, 3
      %p156 = pnand %p154, %p155
      %p157 = pneg %p156
      // Predicated region
      $region29: #{tpu_custom_call.1} parent=5 // pred_check
        _
      $region30: #{tpu_custom_call.1} parent=5 // pred_check_branch
        %159 = sbr.rel (%p156) target = $region32
      $region31: #{tpu_custom_call.1} parent=5 // pred_region
        %s160 = ssub.s32 %s15, 1
        %s161 = sand.u32 %s28, 1
        %s162 = scalar_lea.sflag [#allocation3], %s161
        %s163 = sand.u32 %s28, 1
        %s164 = smul.addr %s163, 16
        %s165 = scalar_lea.vmem [#allocation2], %s164
        // Predicated region
        $region33: #{tpu_custom_call.1} parent=31 // pred_check
          %p166 = pneg %p41
        $region34: #{tpu_custom_call.1} parent=31 // pred_check_branch
          %168 = sbr.rel (%p166) target = $region36
        $region35: #{tpu_custom_call.1} parent=31 // pred_region
          %170 = dma.done %s162, 256
        $region36: #{tpu_custom_call.1} parent=31 // pred_fallthru
          _
        %s171 = sand.u32 %s28, 1
        %s172 = scalar_lea.sflag [#allocation3], %s171
        %s173 = sand.u32 %s28, 1
        %s174 = smul.addr %s173, 16
        %s175 = scalar_lea.vmem [#allocation2], %s174
        %p176 = pneg %p41
        %p177 = pneg %p38
        %p178 = pneg %p62
        %p179 = pneg %p59
        %p180 = pneg %p83
        %p181 = pneg %p80
        %p182 = pneg %p109
        %p183 = pneg %p106
        %s184 = sand.u32 %s96, 1
        %s185 = scalar_lea.sflag [#allocation4], %s184
        %s186 = sand.u32 %s96, 1
        %s187 = smul.addr %s186, 16
        %s188 = scalar_lea.vmem [#allocation5], %s187
        %v189 = vld [vmem:[%s165] sm:$0xff]
        %v190 = vld [vmem:[%s165 + $0x8] sm:$0xff]
        %v191 = vadd.f32 %v189, %v190
        %192 = vadd.xlane.f32.xlu0 %v191
        %v193 = vpop.xlane.xlu0 %192
        %v194 = vmul.f32 %v193, 0.00390625
        %v195 = vld [vmem:[%s1] sm:$0xff]
        %v197 = vlaneseq
        %v198 = vand.u32 %v197, 127
        %v199 = vperm.slane %v194, %v198
        %vm200 = vcmask 64512
        %v201 = vsel %vm200, %v199, 0
        %203 = vmatpush.msra.mxu0 0.0
        %204 = vmatpush.msra.mxu0 0.0
        %205 = vmatpush.msra.mxu0 0.0
        %206 = vmatpush.msra.mxu0 0.0
        %207 = vmatpush.msra.mxu0 0.0
        %208 = vmatpush.msra.mxu0 0.0
        %209 = vmatpush.msra.mxu0 0.0
        %210 = vmatpush.msra.mxu0 0.0
        %211 = vmatpush.msra.mxu0 0.0
        %212 = vmatpush.msra.mxu0 0.0
        %213 = vmatpush.msra.mxu0 0.0
        %214 = vmatpush.msra.mxu0 0.0
        %215 = vmatpush.msra.mxu0 0.0
        %216 = vmatpush.msra.mxu0 0.0
        %217 = vmatpush.msra.mxu0 0.0
        %218 = vmatpush.msra.mxu0 %v195
        %219 = vmatmul.f32.gmra.mxu0 %v201
        %v220 = vpop.f32.mrf.mxu0
        %v221 = vadd.f32 0.0, %v220
        %222 = vdwg.mxu0
        %v223 = vmax.f32 %v221, 0.0
        %v224 = vld [vmem:[%s2] sm:$0xf]
        %vm225 = vcmask 31744
        %v227 = vsel %vm225, %v223, 0
        %vm229 = vcmask 1043456
        %v231 = vsel %vm229, %v224, 0
        %233 = vmatpush.msra.mxu0 0.0
        %234 = vmatpush.msra.mxu0 0.0
        %235 = vmatpush.msra.mxu0 0.0
        %236 = vmatpush.msra.mxu0 0.0
        %237 = vmatpush.msra.mxu0 0.0
        %238 = vmatpush.msra.mxu0 0.0
        %239 = vmatpush.msra.mxu0 0.0
        %240 = vmatpush.msra.mxu0 0.0
        %241 = vmatpush.msra.mxu0 0.0
        %242 = vmatpush.msra.mxu0 0.0
        %243 = vmatpush.msra.mxu0 0.0
        %244 = vmatpush.msra.mxu0 0.0
        %245 = vmatpush.msra.mxu0 0.0
        %246 = vmatpush.msra.mxu0 0.0
        %247 = vmatpush.msra.mxu0 0.0
        %248 = vmatpush.msra.mxu0 %v231
        %249 = vmatmul.f32.gmra.mxu0 %v227
        %v250 = vpop.f32.mrf.mxu0
        %v251 = vadd.f32 0.0, %v250
        %252 = vdwg.mxu0
        %v253 = vxor.u32 %v251, 2147483648
        %v254 = vmul.f32 %v253, 1.442695
        %v255 = vpow.pop %v254
        %v256 = vadd.f32 %v255, 1.0
        %v257 = vrcp.pop %v256
        %v258 = vmul.f32 %v256, %v257
        %v259 = vsub.f32 1.0, %v258
        %v260 = vmul.f32 %v257, %v259
        %v261 = vadd.f32 %v257, %v260
        %vm262 = vweird.f32 %v256
        %vm263 = vweird.f32 %v257
        %vm264 = vmor %vm262, %vm263
        %v265 = vsel %vm264, %v257, %v261
        %v266 = vand.u32 2147483647, %v256
        %vm267 = vcmp.eq.f32.partialorder %v266, 8.507059e+37
        %v268 = vand.u32 %v256, 2147483648
        %v269 = vor.u32 1.1754944e-38, %v268
        %v270 = vsel %vm267, %v269, %v265
        %v271 = vmul.f32 1.0, %v270
        %v272 = vperm.slane %v271, 0
        %v273 = vlaneseq
        %v274 = vshrl.u32 %v273, 7
        %276 = vset.pattern.permute.xlu0 %v274
        %277 = vperm.xlu0 %276, %v272
        %v278 = vpop.permute.xlu0 %277
        %v279 = vmul.f32 %v189, %v278
        %v280 = vmul.f32 %v190, %v278
        %281 = vst [vmem:[%s188] sm:$0xff] %v279
        %282 = vst [vmem:[%s188 + $0x8] sm:$0xff] %v280
        %s283 = sand.u32 %s96, 1
        %s284 = scalar_lea.sflag [#allocation4], %s283
        %s285 = sand.u32 %s96, 1
        %s286 = smul.addr %s285, 16
        %s287 = scalar_lea.vmem [#allocation5], %s286
        // Predicated region
        $region37: #{tpu_custom_call.1} parent=31 // pred_check
          %p288 = pneg %p106
        $region38: #{tpu_custom_call.1} parent=31 // pred_check_branch
          %290 = sbr.rel (%p288) target = $region40
        $region39: #{tpu_custom_call.1} parent=31 // pred_region
          %292 = vsyncadd %s284, 0
          %s293 = smul.addr %s20, 2
          %s294 = smul.addr %s293, 8
          %s295 = scalar_lea.hbm %s3, %s294
          %s297 = sshll.u32 %s287, 4
          %s298 = int_to_ptr.vmem [resolvable:$true] %s297
          %s299 = sshll.u32 %s295, 4
          %s300 = int_to_ptr.hbm [resolvable:$true] %s299
          %302 = dma.vmem_to_hbm [thread:$0]  %s298, 256, %s300, %s284
        $region40: #{tpu_custom_call.1} parent=31 // pred_fallthru
          _
      $region32: #{tpu_custom_call.1} parent=5 // pred_fallthru
        _
      %p303 = scmp.le.s32.totalorder 2, %s15
      // Predicated region
      $region41: #{tpu_custom_call.1} parent=5 // pred_check
        %p304 = pneg %p303
      $region42: #{tpu_custom_call.1} parent=5 // pred_check_branch
        %306 = sbr.rel (%p304) target = $region44
      $region43: #{tpu_custom_call.1} parent=5 // pred_region
        %s307 = ssub.s32 %s15, 2
        // Predicated region
        $region45: #{tpu_custom_call.1} parent=43 // pred_check
          %p308 = pneg %p112
        $region46: #{tpu_custom_call.1} parent=43 // pred_check_branch
          %310 = sbr.rel (%p308) target = $region48
        $region47: #{tpu_custom_call.1} parent=43 // pred_region
          %s311 = sand.u32 %s97, 1
          %s312 = scalar_lea.sflag [#allocation4], %s311
          %s313 = sand.u32 %s97, 1
          %s314 = smul.addr %s313, 16
          %s315 = scalar_lea.vmem [#allocation5], %s314
          %317 = dma.done %s312, 256
        $region48: #{tpu_custom_call.1} parent=43 // pred_fallthru
          _
      $region44: #{tpu_custom_call.1} parent=5 // pred_fallthru
        _
    $region6: #{tpu_custom_call.1} parent=1 // loop_footer
      %s19 = sadd.s32 1, %s15
    $region7: #{tpu_custom_call.1} parent=1 // loop_footer_branch
      %14 = sbr.rel target = $region3
    $region8: #{tpu_custom_call.1} parent=1 // loop_exit
      _
    %318 = vsyncpa [#allocation3], 1
    %s319 = scalar_lea.sflag [#allocation3], 1
    %320 = vsyncpa %s319, 1
    %321 = vsyncpa [#allocation4], 1
    %s322 = scalar_lea.sflag [#allocation4], 1
    %323 = vsyncpa %s322, 1

</llo_original>
